<compile_context>
chip_gen: v6e
topology: v6e:2x2x1
jax: 0.10.0
libtpu: 0.0.40
codegen_flags: <defaults>
</compile_context>

<pallas_src>
import math
import functools

import jax
import jax.numpy as jnp
from jax.experimental import pallas as pl
from jax.experimental.pallas import tpu as pltpu


# ----------------------------------------------------------------------------
# Parameters derived exactly like LoRAConvsByRandom.shift()
# ----------------------------------------------------------------------------
def _shift_params(big_kernel, small_kernel):
    mink, maxk = min(small_kernel, big_kernel), max(small_kernel, big_kernel)
    nk = math.ceil(maxk / mink)
    padding = mink - 1
    mid = maxk // 2
    real_pad = [mid - i * mink - padding for i in range(nk)]
    return mink, maxk, nk, padding, real_pad


def _round_up(a, m):
    return -(-a // m) * m


# ----------------------------------------------------------------------------
# Lane-axis block selection.  Legal lane blocks are the full extent N or any
# multiple of 128 (Mosaic lane rule).  Prefer >=2 grid steps (pipelining /
# dual-TC sharding) with minimal lane padding; never degenerates to 4 KiB
# tiles for awkward N.
# ----------------------------------------------------------------------------
def _pick_lane_block(n, cost_fn, budget):
    full_ok = cost_fn(n) <= budget
    mult = [m for m in range(128, n, 128) if cost_fn(m) <= budget]
    if full_ok and (not mult or n <= 256):
        return n
    if mult:
        best_pad = min(_round_up(n, m) for m in mult)
        return max(m for m in mult if _round_up(n, m) == best_pad)
    if full_ok:
        return n
    # TODO(synk): even a 128-lane block exceeds the conservative budget (huge
    # spatial dims); fall back and let vmem_limit_bytes below absorb it.
    return min(n, 128)


# ----------------------------------------------------------------------------
# Pallas kernel.
#   x_ref : (nk, S_in, U, TB)   branches x shift-axis x cropped-axis x groups
#   o_ref : (S_out, U, TB)      summed & shifted result
# `plan` is a static tuple of (branch, src0, src1, dst0, dst1) windows along
# the shift axis, sorted so a branch fully covering the output comes first.
# That branch initialises o_ref by assignment (no zero-fill / scratch / crop
# passes); the rest accumulate into sub-windows.  All slices are on outer
# (non lane/sublane) axes => pure address offsets; the (U, TB) minor dims are
# always full => lane-dense stores.
# ----------------------------------------------------------------------------
def _shift_add_kernel(x_ref, o_ref, *, plan, s_out):
    if plan and plan[0][3] == 0 and plan[0][4] == s_out:
        i, s0, s1, _, _ = plan[0]
        o_ref[...] = x_ref[i, s0:s1]
        rest = plan[1:]
    else:
        o_ref[...] = jnp.zeros(o_ref.shape, o_ref.dtype)
        rest = plan
    for (i, s0, s1, d0, d1) in rest:
        o_ref[d0:d1] += x_ref[i, s0:s1]


# ----------------------------------------------------------------------------
# Wrapper: layout plumbing (NCHW -> (nk, S, U, N) with yy crop folded in),
# static shift-plan construction, padded-VMEM-aware tiling, pallas_call.
# ----------------------------------------------------------------------------
def lora_convs_by_random_forward(inputs, ori_h, ori_w, isH, *,
                                 big_kernel, small_kernel, stride=1):
    mink, maxk, nk, padding, real_pad = _shift_params(big_kernel, small_kernel)
    ori_p = maxk // 2
    yy = max(padding - mink // 2, 0)
    offs = [-p for p in real_pad]          # output idx reads input idx + off_i

    B, C, H, W = inputs.shape
    assert C % nk == 0, "channels must be a multiple of nk"
    g = C // nk
    N = B * g
    dtype = inputs.dtype

    # channel ch = group * nk + branch  (matches reshape(b, -1, nk, h, w))
    x5 = inputs.reshape(B, g, nk, H, W)

    if isH:
        s_in, u = W, H - 2 * yy
        s_out = (ori_w + 2 * ori_p - maxk) // stride + 1
        xw = jnp.transpose(x5[:, :, :, yy:H - yy, :], (2, 4, 3, 0, 1))
    else:
        s_in, u = H, W - 2 * yy
        s_out = (ori_h + 2 * ori_p - maxk) // stride + 1
        xw = jnp.transpose(x5[:, :, :, :, yy:W - yy], (2, 3, 4, 0, 1))
    xw = xw.reshape(nk, s_in, u, N)

    # Static shift plan along S; fully out-of-range branches are skipped
    # (equivalent to adding only zero padding).
    plan = []
    for i, off in enumerate(offs):
        d0, d1 = max(0, -off), min(s_out, s_in - off)
        if d1 > d0:
            plan.append((i, d0 + off, d1 + off, d0, d1))
    plan.sort(key=lambda e: 0 if (e[3] == 0 and e[4] == s_out) else 1)
    plan = tuple(plan)

    # ---- VMEM accounting in PADDED (sublane, 128-lane) tile bytes ----
    itemsize = jnp.dtype(dtype).itemsize
    sub = {4: 8, 2: 16, 1: 32}.get(itemsize, 8)

    def padded_cost(tb):
        lane = _round_up(tb, 128)
        in_tile = nk * s_in * _round_up(u, sub) * lane * itemsize
        out_tile = s_out * _round_up(u, sub) * lane * itemsize
        return 2 * (in_tile + out_tile)          # double-buffered in + out

    budget = 20 * 1024 * 1024    # fits 32 MiB scoped VMEM with headroom on all chips
    tb = _pick_lane_block(N, padded_cost, budget)
    if tb >= N:
        tb, n_pad = N, N
    else:
        n_pad = _round_up(N, tb)
        if n_pad != N:
            xw = jnp.pad(xw, ((0, 0), (0, 0), (0, 0), (0, n_pad - N)))
    grid = n_pad // tb

    vmem_limit = max(32 * 1024 * 1024,
                     min(padded_cost(tb) * 5 // 4, 56 * 1024 * 1024))

    kernel = functools.partial(_shift_add_kernel, plan=plan, s_out=s_out)
    cost_est = pl.CostEstimate(
        flops=int(nk * N * s_out * u),
        transcendentals=0,
        bytes_accessed=int((nk * s_in + s_out) * u * N * itemsize),
    )

    out = pl.pallas_call(
        kernel,
        out_shape=jax.ShapeDtypeStruct((s_out, u, n_pad), dtype),
        grid=(grid,),
        in_specs=[pl.BlockSpec((nk, s_in, u, tb), lambda n: (0, 0, 0, n))],
        out_specs=pl.BlockSpec((s_out, u, tb), lambda n: (0, 0, n)),
        compiler_params=pltpu.CompilerParams(
            dimension_semantics=("parallel",),
            vmem_limit_bytes=int(vmem_limit)),
        cost_estimate=cost_est,
    )(xw)

    out = out[:, :, :N]
    if isH:
        # (w_out, h_out, N) -> (B, g, h_out, w_out)
        out = jnp.transpose(out, (2, 1, 0)).reshape(B, g, u, s_out)
    else:
        # (h_out, w_out, N) -> (B, g, h_out, w_out)
        out = jnp.transpose(out, (2, 0, 1)).reshape(B, g, s_out, u)
    return out


# ----------------------------------------------------------------------------
# Pure-JAX reference mirroring the PyTorch forward step-by-step (for checking).
# ----------------------------------------------------------------------------
def _ref_forward(inputs, ori_h, ori_w, isH, *, big_kernel, small_kernel, stride=1):
    mink, maxk, nk, padding, real_pad = _shift_params(big_kernel, small_kernel)
    VH = 'H' if isH else 'V'
    b, c, h, w = inputs.shape
    out = inputs.reshape(b, -1, nk, h, w)
    ori_k, ori_p, k = maxk, maxk // 2, mink
    acc = 0
    for i in range(nk):
        x = out[:, :, i]
        pad = real_pad[i]
        if pad < 0:
            pad_l, s = 0, -pad
        else:
            pad_l, s = pad, 0
        if VH == 'H':
            suppose_len = (ori_w + 2 * ori_p - ori_k) // stride + 1
            pad_r = 0 if s + suppose_len <= w + pad_l else s + suppose_len - w - pad_l
            x = jnp.pad(x, ((0, 0), (0, 0), (0, 0), (pad_l, pad_r)))
        else:
            suppose_len = (ori_h + 2 * ori_p - ori_k) // stride + 1
            pad_r = 0 if s + suppose_len <= h + pad_l else s + suppose_len - h - pad_l
            x = jnp.pad(x, ((0, 0), (0, 0), (pad_l, pad_r), (0, 0)))
        yy = padding - k // 2
        if yy > 0:
            if VH == 'H':
                x = x[:, :, yy:yy + h - 2 * yy, :]
            else:
                x = x[:, :, :, yy:yy + w - 2 * yy]
        if VH == 'H':
            xs = x[:, :, :, s:s + suppose_len]
        else:
            xs = x[:, :, s:s + suppose_len, :]
        acc = acc + xs
    return acc


if __name__ == "__main__":
    big_kernel, small_kernel, stride = 7, 3, 1
    nk = math.ceil(big_kernel / small_kernel)          # 3
    b, g = 2, 4
    c = g * nk                                         # 12
    ori_h = ori_w = 16
    # feature map entering this module (as produced by the preceding small conv
    # with kernel=small_kernel, padding=small_kernel-1): ori + 2*padding - k + 1
    h = ori_h + 2 * (small_kernel - 1) - small_kernel + 1   # 18
    w = ori_w + 2 * (small_kernel - 1) - small_kernel + 1   # 18

    key = jax.random.PRNGKey(0)
    x = jax.random.normal(key, (b, c, h, w), dtype=jnp.float32)

    # H direction
    out_h = lora_convs_by_random_forward(
        x, ori_h, ori_w, True,
        big_kernel=big_kernel, small_kernel=small_kernel, stride=stride)
    jax.block_until_ready(out_h)
    ref_h = _ref_forward(x, ori_h, ori_w, True,
                         big_kernel=big_kernel, small_kernel=small_kernel, stride=stride)
    assert out_h.shape == ref_h.shape
    assert jnp.allclose(out_h, ref_h, atol=1e-5, rtol=1e-5)

    # V direction
    out_v = lora_convs_by_random_forward(
        x, ori_h, ori_w, False,
        big_kernel=big_kernel, small_kernel=small_kernel, stride=stride)
    jax.block_until_ready(out_v)
    ref_v = _ref_forward(x, ori_h, ori_w, False,
                         big_kernel=big_kernel, small_kernel=small_kernel, stride=stride)
    assert out_v.shape == ref_v.shape
    assert jnp.allclose(out_v, ref_v, atol=1e-5, rtol=1e-5)

    print("KERNEL_OK")
</pallas_src>

<mosaic_0001>
module attributes {stable_mosaic.version = 11 : i64} {
  func.func @_shift_add_kernel(%arg0: i32, %arg1: memref<3x18x16x8xf32, #tpu.memory_space<vmem>>, %arg2: memref<16x16x8xf32, #tpu.memory_space<vmem>>) attributes {dimension_semantics = [#tpu.dimension_semantics<parallel>], iteration_bounds = array<i64: 1>, scalar_prefetch = 0 : i64, scratch_operands = 0 : i64, tpu.core_type = #tpu.core_type<tc>, window_params = [{transform_indices = @transform_0, window_bounds = array<i64: 3, 18, 16, 8>}, {transform_indices = @transform_1, window_bounds = array<i64: 16, 16, 8>}]} {
    %c1 = arith.constant 1 : index
    %c2 = arith.constant 2 : index
    %c0 = arith.constant 0 : index
    %c0_0 = arith.constant 0 : index
    %0 = vector.load %arg1[%c1, %c2, %c0, %c0_0] : memref<3x18x16x8xf32, #tpu.memory_space<vmem>>, vector<1x16x16x8xf32>
    %1 = vector.shape_cast %0 : vector<1x16x16x8xf32> to vector<16x16x8xf32>
    %c0_1 = arith.constant 0 : index
    %c0_2 = arith.constant 0 : index
    %c0_3 = arith.constant 0 : index
    %2 = vector.load %arg2[%c0_1, %c0_2, %c0_3] : memref<16x16x8xf32, #tpu.memory_space<vmem>>, vector<16x16x8xf32>
    tpu.vector_store %arg2[%c0_1, %c0_2, %c0_3], %1 {strides = array<i32>} : memref<16x16x8xf32, #tpu.memory_space<vmem>>, vector<16x16x8xf32>,
    %c1_4 = arith.constant 1 : index
    %c0_5 = arith.constant 0 : index
    %c0_6 = arith.constant 0 : index
    %3 = vector.load %arg2[%c1_4, %c0_5, %c0_6] : memref<16x16x8xf32, #tpu.memory_space<vmem>>, vector<15x16x8xf32>
    %c0_7 = arith.constant 0 : index
    %c0_8 = arith.constant 0 : index
    %c0_9 = arith.constant 0 : index
    %c0_10 = arith.constant 0 : index
    %4 = vector.load %arg1[%c0_7, %c0_8, %c0_9, %c0_10] : memref<3x18x16x8xf32, #tpu.memory_space<vmem>>, vector<1x15x16x8xf32>
    %5 = vector.shape_cast %4 : vector<1x15x16x8xf32> to vector<15x16x8xf32>
    %6 = arith.addf %3, %5 : vector<15x16x8xf32>
    %c1_11 = arith.constant 1 : index
    %c0_12 = arith.constant 0 : index
    %c0_13 = arith.constant 0 : index
    %7 = vector.load %arg2[%c1_11, %c0_12, %c0_13] : memref<16x16x8xf32, #tpu.memory_space<vmem>>, vector<15x16x8xf32>
    tpu.vector_store %arg2[%c1_11, %c0_12, %c0_13], %6 {strides = array<i32>} : memref<16x16x8xf32, #tpu.memory_space<vmem>>, vector<15x16x8xf32>,
    %c0_14 = arith.constant 0 : index
    %c0_15 = arith.constant 0 : index
    %c0_16 = arith.constant 0 : index
    %8 = vector.load %arg2[%c0_14, %c0_15, %c0_16] : memref<16x16x8xf32, #tpu.memory_space<vmem>>, vector<13x16x8xf32>
    %c2_17 = arith.constant 2 : index
    %c5 = arith.constant 5 : index
    %c0_18 = arith.constant 0 : index
    %c0_19 = arith.constant 0 : index
    %9 = vector.load %arg1[%c2_17, %c5, %c0_18, %c0_19] : memref<3x18x16x8xf32, #tpu.memory_space<vmem>>, vector<1x13x16x8xf32>
    %10 = vector.shape_cast %9 : vector<1x13x16x8xf32> to vector<13x16x8xf32>
    %11 = arith.addf %8, %10 : vector<13x16x8xf32>
    %c0_20 = arith.constant 0 : index
    %c0_21 = arith.constant 0 : index
    %c0_22 = arith.constant 0 : index
    %12 = vector.load %arg2[%c0_20, %c0_21, %c0_22] : memref<16x16x8xf32, #tpu.memory_space<vmem>>, vector<13x16x8xf32>
    tpu.vector_store %arg2[%c0_20, %c0_21, %c0_22], %11 {strides = array<i32>} : memref<16x16x8xf32, #tpu.memory_space<vmem>>, vector<13x16x8xf32>,
    return
  }
  func.func @transform_0(%arg0: i32) -> (i32, i32, i32, i32) {
    %c0_i32 = arith.constant 0 : i32
    %c0_i32_0 = arith.constant 0 : i32
    %c0_i32_1 = arith.constant 0 : i32
    %c0_i32_2 = arith.constant 0 : i32
    return %c0_i32, %c0_i32_0, %c0_i32_1, %arg0 : i32, i32, i32, i32
  }
  func.func @transform_1(%arg0: i32) -> (i32, i32, i32) {
    %c0_i32 = arith.constant 0 : i32
    %c0_i32_0 = arith.constant 0 : i32
    %c0_i32_1 = arith.constant 0 : i32
    return %c0_i32, %c0_i32_0, %arg0 : i32, i32, i32
  }
}

</mosaic_0001>

<llo_original>
// kernel: tpu_custom_call.1
$region0: #{tpu_custom_call.1}
  #allocation0 [shape = 'u32[]', space=smem, size = 0x4, offset = 0x4, fixed_abs, tag = 'smem constant byte address 0x4 - core index']
  #allocation1 [shape = 'u32[144,128]{1,0:T(1,128)}', space=vmem, size = 0x12000, scoped, tag = 'internal scratch']
  %s0 = inlined_call_operand.vmem [shape: f32[3,18,16,8], index: 0, kind: input, shape index: {}]
  %s1 = inlined_call_operand.vmem [shape: f32[16,16,8], index: 1, kind: output, shape index: {}]
  %s2 = sld [smem:[#allocation0]]
  $region14: #{tpu_custom_call.1} parent=0
    _
  %s4 = ssub.s32 1, %s2
  %s5 = scalar_select 0, %s4, %s2
  // Predicated region
  $region2: #{tpu_custom_call.1} parent=0 // pred_check
    _
  $region3: #{tpu_custom_call.1} parent=0 // pred_check_branch
    %7 = sbr.rel (0) target = $region5
  $region4: #{tpu_custom_call.1} parent=0 // pred_region
    _
  $region5: #{tpu_custom_call.1} parent=0 // pred_fallthru
    _
  %s8 = scalar_lea.vmem %s0, 320
  %v9 = vld [vmem:[%s8] sm:$0xff]
  %v10 = vld [vmem:[%s8 + $0x8] sm:$0xff]
  %v11 = vld [vmem:[%s8 + $0x10] sm:$0xff]
  %v12 = vld [vmem:[%s8 + $0x18] sm:$0xff]
  %v13 = vld [vmem:[%s8 + $0x20] sm:$0xff]
  %v14 = vld [vmem:[%s8 + $0x28] sm:$0xff]
  %v15 = vld [vmem:[%s8 + $0x30] sm:$0xff]
  %v16 = vld [vmem:[%s8 + $0x38] sm:$0xff]
  %v17 = vld [vmem:[%s8 + $0x40] sm:$0xff]
  %v18 = vld [vmem:[%s8 + $0x48] sm:$0xff]
  %v19 = vld [vmem:[%s8 + $0x50] sm:$0xff]
  %v20 = vld [vmem:[%s8 + $0x58] sm:$0xff]
  %v21 = vld [vmem:[%s8 + $0x60] sm:$0xff]
  %v22 = vld [vmem:[%s8 + $0x68] sm:$0xff]
  %v23 = vld [vmem:[%s8 + $0x70] sm:$0xff]
  %v24 = vld [vmem:[%s8 + $0x78] sm:$0xff]
  %v25 = vld [vmem:[%s8 + $0x80] sm:$0xff]
  %v26 = vld [vmem:[%s8 + $0x88] sm:$0xff]
  %v27 = vld [vmem:[%s8 + $0x90] sm:$0xff]
  %v28 = vld [vmem:[%s8 + $0x98] sm:$0xff]
  %v29 = vld [vmem:[%s8 + $0xa0] sm:$0xff]
  %v30 = vld [vmem:[%s8 + $0xa8] sm:$0xff]
  %v31 = vld [vmem:[%s8 + $0xb0] sm:$0xff]
  %v32 = vld [vmem:[%s8 + $0xb8] sm:$0xff]
  %v33 = vld [vmem:[%s8 + $0xc0] sm:$0xff]
  %v34 = vld [vmem:[%s8 + $0xc8] sm:$0xff]
  %v35 = vld [vmem:[%s8 + $0xd0] sm:$0xff]
  %v36 = vld [vmem:[%s8 + $0xd8] sm:$0xff]
  %v37 = vld [vmem:[%s8 + $0xe0] sm:$0xff]
  %v38 = vld [vmem:[%s8 + $0xe8] sm:$0xff]
  %v39 = vld [vmem:[%s8 + $0xf0] sm:$0xff]
  %v40 = vld [vmem:[%s8 + $0xf8] sm:$0xff]
  %vm41 = vcmask 64512
  %42 = vst.msk [vmem:[%s1] sm:$0xff] %vm41, %v9
  %43 = vst.msk [vmem:[%s1 + $0x8] sm:$0xff] %vm41, %v10
  %44 = vst.msk [vmem:[%s1 + $0x10] sm:$0xff] %vm41, %v11
  %45 = vst.msk [vmem:[%s1 + $0x18] sm:$0xff] %vm41, %v12
  %46 = vst.msk [vmem:[%s1 + $0x20] sm:$0xff] %vm41, %v13
  %47 = vst.msk [vmem:[%s1 + $0x28] sm:$0xff] %vm41, %v14
  %48 = vst.msk [vmem:[%s1 + $0x30] sm:$0xff] %vm41, %v15
  %49 = vst.msk [vmem:[%s1 + $0x38] sm:$0xff] %vm41, %v16
  %50 = vst.msk [vmem:[%s1 + $0x40] sm:$0xff] %vm41, %v17
  %51 = vst.msk [vmem:[%s1 + $0x48] sm:$0xff] %vm41, %v18
  %52 = vst.msk [vmem:[%s1 + $0x50] sm:$0xff] %vm41, %v19
  %53 = vst.msk [vmem:[%s1 + $0x58] sm:$0xff] %vm41, %v20
  %54 = vst.msk [vmem:[%s1 + $0x60] sm:$0xff] %vm41, %v21
  %55 = vst.msk [vmem:[%s1 + $0x68] sm:$0xff] %vm41, %v22
  %56 = vst.msk [vmem:[%s1 + $0x70] sm:$0xff] %vm41, %v23
  %57 = vst.msk [vmem:[%s1 + $0x78] sm:$0xff] %vm41, %v24
  %58 = vst.msk [vmem:[%s1 + $0x80] sm:$0xff] %vm41, %v25
  %59 = vst.msk [vmem:[%s1 + $0x88] sm:$0xff] %vm41, %v26
  %60 = vst.msk [vmem:[%s1 + $0x90] sm:$0xff] %vm41, %v27
  %61 = vst.msk [vmem:[%s1 + $0x98] sm:$0xff] %vm41, %v28
  %62 = vst.msk [vmem:[%s1 + $0xa0] sm:$0xff] %vm41, %v29
  %63 = vst.msk [vmem:[%s1 + $0xa8] sm:$0xff] %vm41, %v30
  %64 = vst.msk [vmem:[%s1 + $0xb0] sm:$0xff] %vm41, %v31
  %65 = vst.msk [vmem:[%s1 + $0xb8] sm:$0xff] %vm41, %v32
  %66 = vst.msk [vmem:[%s1 + $0xc0] sm:$0xff] %vm41, %v33
  %67 = vst.msk [vmem:[%s1 + $0xc8] sm:$0xff] %vm41, %v34
  %68 = vst.msk [vmem:[%s1 + $0xd0] sm:$0xff] %vm41, %v35
  %69 = vst.msk [vmem:[%s1 + $0xd8] sm:$0xff] %vm41, %v36
  %70 = vst.msk [vmem:[%s1 + $0xe0] sm:$0xff] %vm41, %v37
  %71 = vst.msk [vmem:[%s1 + $0xe8] sm:$0xff] %vm41, %v38
  %72 = vst.msk [vmem:[%s1 + $0xf0] sm:$0xff] %vm41, %v39
  %73 = vst.msk [vmem:[%s1 + $0xf8] sm:$0xff] %vm41, %v40
  %s74 = scalar_lea.vmem %s1, 16
  %v75 = vld [vmem:[%s74] sm:$0xff]
  %v76 = vld [vmem:[%s74 + $0x8] sm:$0xff]
  %v77 = vld [vmem:[%s74 + $0x10] sm:$0xff]
  %v78 = vld [vmem:[%s74 + $0x18] sm:$0xff]
  %v79 = vld [vmem:[%s74 + $0x20] sm:$0xff]
  %v80 = vld [vmem:[%s74 + $0x28] sm:$0xff]
  %v81 = vld [vmem:[%s74 + $0x30] sm:$0xff]
  %v82 = vld [vmem:[%s74 + $0x38] sm:$0xff]
  %v83 = vld [vmem:[%s74 + $0x40] sm:$0xff]
  %v84 = vld [vmem:[%s74 + $0x48] sm:$0xff]
  %v85 = vld [vmem:[%s74 + $0x50] sm:$0xff]
  %v86 = vld [vmem:[%s74 + $0x58] sm:$0xff]
  %v87 = vld [vmem:[%s74 + $0x60] sm:$0xff]
  %v88 = vld [vmem:[%s74 + $0x68] sm:$0xff]
  %v89 = vld [vmem:[%s74 + $0x70] sm:$0xff]
  %v90 = vld [vmem:[%s74 + $0x78] sm:$0xff]
  %v91 = vld [vmem:[%s74 + $0x80] sm:$0xff]
  %v92 = vld [vmem:[%s74 + $0x88] sm:$0xff]
  %v93 = vld [vmem:[%s74 + $0x90] sm:$0xff]
  %v94 = vld [vmem:[%s74 + $0x98] sm:$0xff]
  %v95 = vld [vmem:[%s74 + $0xa0] sm:$0xff]
  %v96 = vld [vmem:[%s74 + $0xa8] sm:$0xff]
  %v97 = vld [vmem:[%s74 + $0xb0] sm:$0xff]
  %v98 = vld [vmem:[%s74 + $0xb8] sm:$0xff]
  %v99 = vld [vmem:[%s74 + $0xc0] sm:$0xff]
  %v100 = vld [vmem:[%s74 + $0xc8] sm:$0xff]
  %v101 = vld [vmem:[%s74 + $0xd0] sm:$0xff]
  %v102 = vld [vmem:[%s74 + $0xd8] sm:$0xff]
  %v103 = vld [vmem:[%s74 + $0xe0] sm:$0xff]
  %v104 = vld [vmem:[%s74 + $0xe8] sm:$0xff]
  %v105 = vld [vmem:[%s0] sm:$0xff]
  %v106 = vld [vmem:[%s0 + $0x8] sm:$0xff]
  %v107 = vld [vmem:[%s0 + $0x10] sm:$0xff]
  %v108 = vld [vmem:[%s0 + $0x18] sm:$0xff]
  %v109 = vld [vmem:[%s0 + $0x20] sm:$0xff]
  %v110 = vld [vmem:[%s0 + $0x28] sm:$0xff]
  %v111 = vld [vmem:[%s0 + $0x30] sm:$0xff]
  %v112 = vld [vmem:[%s0 + $0x38] sm:$0xff]
  %v113 = vld [vmem:[%s0 + $0x40] sm:$0xff]
  %v114 = vld [vmem:[%s0 + $0x48] sm:$0xff]
  %v115 = vld [vmem:[%s0 + $0x50] sm:$0xff]
  %v116 = vld [vmem:[%s0 + $0x58] sm:$0xff]
  %v117 = vld [vmem:[%s0 + $0x60] sm:$0xff]
  %v118 = vld [vmem:[%s0 + $0x68] sm:$0xff]
  %v119 = vld [vmem:[%s0 + $0x70] sm:$0xff]
  %v120 = vld [vmem:[%s0 + $0x78] sm:$0xff]
  %v121 = vld [vmem:[%s0 + $0x80] sm:$0xff]
  %v122 = vld [vmem:[%s0 + $0x88] sm:$0xff]
  %v123 = vld [vmem:[%s0 + $0x90] sm:$0xff]
  %v124 = vld [vmem:[%s0 + $0x98] sm:$0xff]
  %v125 = vld [vmem:[%s0 + $0xa0] sm:$0xff]
  %v126 = vld [vmem:[%s0 + $0xa8] sm:$0xff]
  %v127 = vld [vmem:[%s0 + $0xb0] sm:$0xff]
  %v128 = vld [vmem:[%s0 + $0xb8] sm:$0xff]
  %v129 = vld [vmem:[%s0 + $0xc0] sm:$0xff]
  %v130 = vld [vmem:[%s0 + $0xc8] sm:$0xff]
  %v131 = vld [vmem:[%s0 + $0xd0] sm:$0xff]
  %v132 = vld [vmem:[%s0 + $0xd8] sm:$0xff]
  %v133 = vld [vmem:[%s0 + $0xe0] sm:$0xff]
  %v134 = vld [vmem:[%s0 + $0xe8] sm:$0xff]
  %v135 = vadd.f32 %v75, %v105
  %v136 = vadd.f32 %v76, %v106
  %v137 = vadd.f32 %v77, %v107
  %v138 = vadd.f32 %v78, %v108
  %v139 = vadd.f32 %v79, %v109
  %v140 = vadd.f32 %v80, %v110
  %v141 = vadd.f32 %v81, %v111
  %v142 = vadd.f32 %v82, %v112
  %v143 = vadd.f32 %v83, %v113
  %v144 = vadd.f32 %v84, %v114
  %v145 = vadd.f32 %v85, %v115
  %v146 = vadd.f32 %v86, %v116
  %v147 = vadd.f32 %v87, %v117
  %v148 = vadd.f32 %v88, %v118
  %v149 = vadd.f32 %v89, %v119
  %v150 = vadd.f32 %v90, %v120
  %v151 = vadd.f32 %v91, %v121
  %v152 = vadd.f32 %v92, %v122
  %v153 = vadd.f32 %v93, %v123
  %v154 = vadd.f32 %v94, %v124
  %v155 = vadd.f32 %v95, %v125
  %v156 = vadd.f32 %v96, %v126
  %v157 = vadd.f32 %v97, %v127
  %v158 = vadd.f32 %v98, %v128
  %v159 = vadd.f32 %v99, %v129
  %v160 = vadd.f32 %v100, %v130
  %v161 = vadd.f32 %v101, %v131
  %v162 = vadd.f32 %v102, %v132
  %v163 = vadd.f32 %v103, %v133
  %v164 = vadd.f32 %v104, %v134
  %165 = vst.msk [vmem:[%s74] sm:$0xff] %vm41, %v135
  %166 = vst.msk [vmem:[%s74 + $0x8] sm:$0xff] %vm41, %v136
  %167 = vst.msk [vmem:[%s74 + $0x10] sm:$0xff] %vm41, %v137
  %168 = vst.msk [vmem:[%s74 + $0x18] sm:$0xff] %vm41, %v138
  %169 = vst.msk [vmem:[%s74 + $0x20] sm:$0xff] %vm41, %v139
  %170 = vst.msk [vmem:[%s74 + $0x28] sm:$0xff] %vm41, %v140
  %171 = vst.msk [vmem:[%s74 + $0x30] sm:$0xff] %vm41, %v141
  %172 = vst.msk [vmem:[%s74 + $0x38] sm:$0xff] %vm41, %v142
  %173 = vst.msk [vmem:[%s74 + $0x40] sm:$0xff] %vm41, %v143
  %174 = vst.msk [vmem:[%s74 + $0x48] sm:$0xff] %vm41, %v144
  %175 = vst.msk [vmem:[%s74 + $0x50] sm:$0xff] %vm41, %v145
  %176 = vst.msk [vmem:[%s74 + $0x58] sm:$0xff] %vm41, %v146
  %177 = vst.msk [vmem:[%s74 + $0x60] sm:$0xff] %vm41, %v147
  %178 = vst.msk [vmem:[%s74 + $0x68] sm:$0xff] %vm41, %v148
  %179 = vst.msk [vmem:[%s74 + $0x70] sm:$0xff] %vm41, %v149
  %180 = vst.msk [vmem:[%s74 + $0x78] sm:$0xff] %vm41, %v150
  %181 = vst.msk [vmem:[%s74 + $0x80] sm:$0xff] %vm41, %v151
  %182 = vst.msk [vmem:[%s74 + $0x88] sm:$0xff] %vm41, %v152
  %183 = vst.msk [vmem:[%s74 + $0x90] sm:$0xff] %vm41, %v153
  %184 = vst.msk [vmem:[%s74 + $0x98] sm:$0xff] %vm41, %v154
  %185 = vst.msk [vmem:[%s74 + $0xa0] sm:$0xff] %vm41, %v155
  %186 = vst.msk [vmem:[%s74 + $0xa8] sm:$0xff] %vm41, %v156
  %187 = vst.msk [vmem:[%s74 + $0xb0] sm:$0xff] %vm41, %v157
  %188 = vst.msk [vmem:[%s74 + $0xb8] sm:$0xff] %vm41, %v158
  %189 = vst.msk [vmem:[%s74 + $0xc0] sm:$0xff] %vm41, %v159
  %190 = vst.msk [vmem:[%s74 + $0xc8] sm:$0xff] %vm41, %v160
  %191 = vst.msk [vmem:[%s74 + $0xd0] sm:$0xff] %vm41, %v161
  %192 = vst.msk [vmem:[%s74 + $0xd8] sm:$0xff] %vm41, %v162
  %193 = vst.msk [vmem:[%s74 + $0xe0] sm:$0xff] %vm41, %v163
  %194 = vst.msk [vmem:[%s74 + $0xe8] sm:$0xff] %vm41, %v164
  %v195 = vld [vmem:[%s1] sm:$0xff]
  %v196 = vld [vmem:[%s1 + $0x8] sm:$0xff]
  %v197 = vld [vmem:[%s1 + $0x10] sm:$0xff]
  %v198 = vld [vmem:[%s1 + $0x18] sm:$0xff]
  %v199 = vld [vmem:[%s1 + $0x20] sm:$0xff]
  %v200 = vld [vmem:[%s1 + $0x28] sm:$0xff]
  %v201 = vld [vmem:[%s1 + $0x30] sm:$0xff]
  %v202 = vld [vmem:[%s1 + $0x38] sm:$0xff]
  %v203 = vld [vmem:[%s1 + $0x40] sm:$0xff]
  %v204 = vld [vmem:[%s1 + $0x48] sm:$0xff]
  %v205 = vld [vmem:[%s1 + $0x50] sm:$0xff]
  %v206 = vld [vmem:[%s1 + $0x58] sm:$0xff]
  %v207 = vld [vmem:[%s1 + $0x60] sm:$0xff]
  %v208 = vld [vmem:[%s1 + $0x68] sm:$0xff]
  %v209 = vld [vmem:[%s1 + $0x70] sm:$0xff]
  %v210 = vld [vmem:[%s1 + $0x78] sm:$0xff]
  %v211 = vld [vmem:[%s1 + $0x80] sm:$0xff]
  %v212 = vld [vmem:[%s1 + $0x88] sm:$0xff]
  %v213 = vld [vmem:[%s1 + $0x90] sm:$0xff]
  %v214 = vld [vmem:[%s1 + $0x98] sm:$0xff]
  %v215 = vld [vmem:[%s1 + $0xa0] sm:$0xff]
  %v216 = vld [vmem:[%s1 + $0xa8] sm:$0xff]
  %v217 = vld [vmem:[%s1 + $0xb0] sm:$0xff]
  %v218 = vld [vmem:[%s1 + $0xb8] sm:$0xff]
  %v219 = vld [vmem:[%s1 + $0xc0] sm:$0xff]
  %v220 = vld [vmem:[%s1 + $0xc8] sm:$0xff]
  %s221 = scalar_lea.vmem %s0, 656
  %v222 = vld [vmem:[%s221] sm:$0xff]
  %v223 = vld [vmem:[%s221 + $0x8] sm:$0xff]
  %v224 = vld [vmem:[%s221 + $0x10] sm:$0xff]
  %v225 = vld [vmem:[%s221 + $0x18] sm:$0xff]
  %v226 = vld [vmem:[%s221 + $0x20] sm:$0xff]
  %v227 = vld [vmem:[%s221 + $0x28] sm:$0xff]
  %v228 = vld [vmem:[%s221 + $0x30] sm:$0xff]
  %v229 = vld [vmem:[%s221 + $0x38] sm:$0xff]
  %v230 = vld [vmem:[%s221 + $0x40] sm:$0xff]
  %v231 = vld [vmem:[%s221 + $0x48] sm:$0xff]
  %v232 = vld [vmem:[%s221 + $0x50] sm:$0xff]
  %v233 = vld [vmem:[%s221 + $0x58] sm:$0xff]
  %v234 = vld [vmem:[%s221 + $0x60] sm:$0xff]
  %v235 = vld [vmem:[%s221 + $0x68] sm:$0xff]
  %v236 = vld [vmem:[%s221 + $0x70] sm:$0xff]
  %v237 = vld [vmem:[%s221 + $0x78] sm:$0xff]
  %v238 = vld [vmem:[%s221 + $0x80] sm:$0xff]
  %v239 = vld [vmem:[%s221 + $0x88] sm:$0xff]
  %v240 = vld [vmem:[%s221 + $0x90] sm:$0xff]
  %v241 = vld [vmem:[%s221 + $0x98] sm:$0xff]
  %v242 = vld [vmem:[%s221 + $0xa0] sm:$0xff]
  %v243 = vld [vmem:[%s221 + $0xa8] sm:$0xff]
  %v244 = vld [vmem:[%s221 + $0xb0] sm:$0xff]
  %v245 = vld [vmem:[%s221 + $0xb8] sm:$0xff]
  %v246 = vld [vmem:[%s221 + $0xc0] sm:$0xff]
  %v247 = vld [vmem:[%s221 + $0xc8] sm:$0xff]
  %v248 = vadd.f32 %v195, %v222
  %v249 = vadd.f32 %v196, %v223
  %v250 = vadd.f32 %v197, %v224
  %v251 = vadd.f32 %v198, %v225
  %v252 = vadd.f32 %v199, %v226
  %v253 = vadd.f32 %v200, %v227
  %v254 = vadd.f32 %v201, %v228
  %v255 = vadd.f32 %v202, %v229
  %v256 = vadd.f32 %v203, %v230
  %v257 = vadd.f32 %v204, %v231
  %v258 = vadd.f32 %v205, %v232
  %v259 = vadd.f32 %v206, %v233
  %v260 = vadd.f32 %v207, %v234
  %v261 = vadd.f32 %v208, %v235
  %v262 = vadd.f32 %v209, %v236
  %v263 = vadd.f32 %v210, %v237
  %v264 = vadd.f32 %v211, %v238
  %v265 = vadd.f32 %v212, %v239
  %v266 = vadd.f32 %v213, %v240
  %v267 = vadd.f32 %v214, %v241
  %v268 = vadd.f32 %v215, %v242
  %v269 = vadd.f32 %v216, %v243
  %v270 = vadd.f32 %v217, %v244
  %v271 = vadd.f32 %v218, %v245
  %v272 = vadd.f32 %v219, %v246
  %v273 = vadd.f32 %v220, %v247
  %274 = vst.msk [vmem:[%s1] sm:$0xff] %vm41, %v248
  %275 = vst.msk [vmem:[%s1 + $0x8] sm:$0xff] %vm41, %v249
  %276 = vst.msk [vmem:[%s1 + $0x10] sm:$0xff] %vm41, %v250
  %277 = vst.msk [vmem:[%s1 + $0x18] sm:$0xff] %vm41, %v251
  %278 = vst.msk [vmem:[%s1 + $0x20] sm:$0xff] %vm41, %v252
  %279 = vst.msk [vmem:[%s1 + $0x28] sm:$0xff] %vm41, %v253
  %280 = vst.msk [vmem:[%s1 + $0x30] sm:$0xff] %vm41, %v254
  %281 = vst.msk [vmem:[%s1 + $0x38] sm:$0xff] %vm41, %v255
  %282 = vst.msk [vmem:[%s1 + $0x40] sm:$0xff] %vm41, %v256
  %283 = vst.msk [vmem:[%s1 + $0x48] sm:$0xff] %vm41, %v257
  %284 = vst.msk [vmem:[%s1 + $0x50] sm:$0xff] %vm41, %v258
  %285 = vst.msk [vmem:[%s1 + $0x58] sm:$0xff] %vm41, %v259
  %286 = vst.msk [vmem:[%s1 + $0x60] sm:$0xff] %vm41, %v260
  %287 = vst.msk [vmem:[%s1 + $0x68] sm:$0xff] %vm41, %v261
  %288 = vst.msk [vmem:[%s1 + $0x70] sm:$0xff] %vm41, %v262
  %289 = vst.msk [vmem:[%s1 + $0x78] sm:$0xff] %vm41, %v263
  %290 = vst.msk [vmem:[%s1 + $0x80] sm:$0xff] %vm41, %v264
  %291 = vst.msk [vmem:[%s1 + $0x88] sm:$0xff] %vm41, %v265
  %292 = vst.msk [vmem:[%s1 + $0x90] sm:$0xff] %vm41, %v266
  %293 = vst.msk [vmem:[%s1 + $0x98] sm:$0xff] %vm41, %v267
  %294 = vst.msk [vmem:[%s1 + $0xa0] sm:$0xff] %vm41, %v268
  %295 = vst.msk [vmem:[%s1 + $0xa8] sm:$0xff] %vm41, %v269
  %296 = vst.msk [vmem:[%s1 + $0xb0] sm:$0xff] %vm41, %v270
  %297 = vst.msk [vmem:[%s1 + $0xb8] sm:$0xff] %vm41, %v271
  %298 = vst.msk [vmem:[%s1 + $0xc0] sm:$0xff] %vm41, %v272
  %299 = vst.msk [vmem:[%s1 + $0xc8] sm:$0xff] %vm41, %v273
  // Predicated region
  $region6: #{tpu_custom_call.1} parent=0 // pred_check
    _
  $region7: #{tpu_custom_call.1} parent=0 // pred_check_branch
    %301 = sbr.rel (0) target = $region9
  $region8: #{tpu_custom_call.1} parent=0 // pred_region
    _
  $region9: #{tpu_custom_call.1} parent=0 // pred_fallthru
    _
  // Predicated region
  $region10: #{tpu_custom_call.1} parent=0 // pred_check
    _
  $region11: #{tpu_custom_call.1} parent=0 // pred_check_branch
    %303 = sbr.rel (0) target = $region13
  $region12: #{tpu_custom_call.1} parent=0 // pred_region
    _
  $region13: #{tpu_custom_call.1} parent=0 // pred_fallthru
    _

</llo_original>
